<compile_context>
chip_gen: v5e
topology: v5e:2x2
jax: 0.10.0
libtpu: 0.0.40
codegen_flags: <defaults>
</compile_context>

<pallas_src>
import functools

import jax
import jax.numpy as jnp
from jax.experimental import pallas as pl
from jax.experimental.pallas import tpu as pltpu

ALPHA = 0.5          # module default
_EPS = 1e-10
_NEG_FILL = -1e30    # lane-padding value: relu->0, tanh->-1, exp(x-m)->0


def _hybrid_relu_bounded_kernel(x_ref, o_ref, *, alpha):
    # x_ref / o_ref: (TM, Vp) tile, Vp = padded vocab (multiple of 128).
    x = x_ref[...].astype(jnp.float32)

    # ReLU-bounded branch (purely elementwise).
    scale = jnp.log1p(jnp.maximum(x, 0.0))
    bounded = jnp.tanh(x / (1.0 + scale))
    relu_probs = 0.5 * (bounded + 1.0)

    # Softmax branch: row reductions + per-row reciprocal (no (TM,V) divide).
    m = jnp.max(x, axis=-1, keepdims=True)
    p = jnp.exp(x - m)
    s = jnp.sum(p, axis=-1, keepdims=True)
    soft_probs = p * pl.reciprocal(s, approx=False)

    combined = alpha * relu_probs + (1.0 - alpha) * soft_probs

    denom = jnp.sum(combined, axis=-1, keepdims=True) + _EPS
    o_ref[...] = (combined * pl.reciprocal(denom, approx=False)).astype(o_ref.dtype)


def _vmem_budget_bytes():
    # ~3/4 of physical VMEM, capped at 100 MiB:
    #   v5e/v6e (128 MiB phys) -> 96 MiB, v7x (64 MiB per TC) -> 48 MiB.
    try:
        info = pltpu.get_tpu_info()
        cap = int(getattr(info, "vmem_capacity_bytes", 64 << 20))
    except Exception:  # pragma: no cover - conservative fallback
        cap = 64 << 20
    return min(cap * 3 // 4, 100 << 20)


def hybrid_relu_bounded_activation(x, *, alpha=ALPHA, tile_rows=None,
                                   vmem_limit_bytes=None):
    """x: (..., vocab) float array (e.g. (batch, seq, vocab)). Same shape/dtype out."""
    orig_shape = x.shape
    vocab = orig_shape[-1]
    x2 = x.reshape(-1, vocab)
    rows = x2.shape[0]

    # Lane-dense last dim: pad vocab to a multiple of 128.
    LANE, SUB = 128, 8
    vocab_p = ((vocab + LANE - 1) // LANE) * LANE

    if vmem_limit_bytes is None:
        vmem_limit_bytes = _vmem_budget_bytes()
    vmem_limit_bytes = int(vmem_limit_bytes)

    if tile_rows is None:
        # Budget ~10 block-sized f32 arrays per row (2x double-buffered in/out
        # + live elementwise intermediates), and keep only half the scoped
        # VMEM for this kernel's blocks.
        per_row_bytes = vocab_p * 4 * 10
        tile_rows = vmem_limit_bytes // (2 * per_row_bytes)
        tile_rows = int(max(SUB, min(512, tile_rows)))
    tile_rows = max(SUB, (int(tile_rows) // SUB) * SUB)

    # Never tile beyond the (sublane-rounded) row count.
    rows_min = ((rows + SUB - 1) // SUB) * SUB
    tile_rows = min(tile_rows, rows_min)
    rows_p = ((rows + tile_rows - 1) // tile_rows) * tile_rows

    xp = x2
    if vocab_p != vocab:
        xp = jnp.pad(xp, ((0, 0), (0, vocab_p - vocab)),
                     constant_values=_NEG_FILL)
    if rows_p != rows:
        xp = jnp.pad(xp, ((0, rows_p - rows), (0, 0)), constant_values=0.0)

    kernel = functools.partial(_hybrid_relu_bounded_kernel, alpha=float(alpha))

    out = pl.pallas_call(
        kernel,
        out_shape=jax.ShapeDtypeStruct((rows_p, vocab_p), x.dtype),
        grid_spec=pltpu.PrefetchScalarGridSpec(
            num_scalar_prefetch=0,
            grid=(rows_p // tile_rows,),
            in_specs=[pl.BlockSpec((tile_rows, vocab_p), lambda i: (i, 0))],
            out_specs=pl.BlockSpec((tile_rows, vocab_p), lambda i: (i, 0)),
        ),
        compiler_params=pltpu.CompilerParams(
            dimension_semantics=("parallel",),   # rows shard across TCs (v7x)
            vmem_limit_bytes=vmem_limit_bytes,
        ),
    )(xp)

    out = out[:rows, :vocab]
    return out.reshape(orig_shape)


def _reference(x, alpha=ALPHA):
    # Pure-JAX mirror of HybridReLUBoundedActivation.forward.
    x = x.astype(jnp.float32)
    scale = jnp.log1p(jax.nn.relu(x))
    bounded = jnp.tanh(x / (1.0 + scale))
    relu_probs = (bounded + 1.0) / 2.0
    soft_probs = jax.nn.softmax(x, axis=-1)
    combined = alpha * relu_probs + (1.0 - alpha) * soft_probs
    return combined / (jnp.sum(combined, axis=-1, keepdims=True) + _EPS)


# TODO(synk): the module's loss() (KL + entropy training objective) is not
# ported; only the forward pass is implemented as a kernel.

if __name__ == "__main__":
    # Small shapes implied by the module: logits are (batch, seq, vocab).
    batch, seq, vocab = 2, 8, 32
    key = jax.random.PRNGKey(0)
    x = jax.random.normal(key, (batch, seq, vocab), dtype=jnp.float32) * 3.0

    out = hybrid_relu_bounded_activation(x)
    out = jax.block_until_ready(out)

    ref = _reference(x)
    assert out.shape == x.shape
    assert jnp.allclose(out, ref, atol=1e-5, rtol=1e-5), "mismatch vs reference"

    print("KERNEL_OK")
</pallas_src>

<mosaic_0001>
module attributes {stable_mosaic.version = 11 : i64} {
  func.func @_hybrid_relu_bounded_kernel(%arg0: i32, %arg1: memref<16x128xf32, #tpu.memory_space<vmem>>, %arg2: memref<16x128xf32, #tpu.memory_space<vmem>>) attributes {dimension_semantics = [#tpu.dimension_semantics<parallel>], iteration_bounds = array<i64: 1>, scalar_prefetch = 0 : i64, scratch_operands = 0 : i64, tpu.core_type = #tpu.core_type<tc>, window_params = [{transform_indices = @transform_0, window_bounds = array<i64: 16, 128>}, {transform_indices = @transform_1, window_bounds = array<i64: 16, 128>}]} {
    %c0 = arith.constant 0 : index
    %c0_0 = arith.constant 0 : index
    %0 = vector.load %arg1[%c0, %c0_0] : memref<16x128xf32, #tpu.memory_space<vmem>>, vector<16x128xf32>
    %cst = arith.constant 0.000000e+00 : f32
    %1 = vector.broadcast %cst : f32 to vector<16x128xf32>
    %2 = arith.maximumf %0, %1 : vector<16x128xf32>
    %3 = math.log1p %2 : vector<16x128xf32>
    %cst_1 = arith.constant 1.000000e+00 : f32
    %4 = vector.broadcast %cst_1 : f32 to vector<16x128xf32>
    %5 = arith.addf %4, %3 : vector<16x128xf32>
    %6 = arith.divf %0, %5 : vector<16x128xf32>
    %7 = math.tanh %6 : vector<16x128xf32>
    %cst_2 = arith.constant 1.000000e+00 : f32
    %8 = vector.broadcast %cst_2 : f32 to vector<16x128xf32>
    %9 = arith.addf %7, %8 : vector<16x128xf32>
    %cst_3 = arith.constant 5.000000e-01 : f32
    %10 = vector.broadcast %cst_3 : f32 to vector<16x128xf32>
    %11 = arith.mulf %10, %9 : vector<16x128xf32>
    %cst_4 = arith.constant dense<0xFF800000> : vector<16xf32>
    %12 = vector.multi_reduction <maximumf>, %0, %cst_4 [1] : vector<16x128xf32> to vector<16xf32>
    %13 = vector.shape_cast %12 : vector<16xf32> to vector<16x1xf32>
    %14 = vector.broadcast %13 : vector<16x1xf32> to vector<16x128xf32>
    %15 = arith.subf %0, %14 : vector<16x128xf32>
    %16 = math.exp %15 : vector<16x128xf32>
    %cst_5 = arith.constant dense<0.000000e+00> : vector<16xf32>
    %17 = vector.multi_reduction <add>, %16, %cst_5 [1] : vector<16x128xf32> to vector<16xf32>
    %18 = vector.shape_cast %17 : vector<16xf32> to vector<16x1xf32>
    %19 = tpu.reciprocal %18 : vector<16x1xf32> -> vector<16x1xf32>
    %20 = vector.broadcast %19 : vector<16x1xf32> to vector<16x128xf32>
    %21 = arith.mulf %16, %20 : vector<16x128xf32>
    %cst_6 = arith.constant 5.000000e-01 : f32
    %22 = vector.broadcast %cst_6 : f32 to vector<16x128xf32>
    %23 = arith.mulf %22, %11 : vector<16x128xf32>
    %cst_7 = arith.constant 5.000000e-01 : f32
    %24 = vector.broadcast %cst_7 : f32 to vector<16x128xf32>
    %25 = arith.mulf %24, %21 : vector<16x128xf32>
    %26 = arith.addf %23, %25 : vector<16x128xf32>
    %cst_8 = arith.constant dense<0.000000e+00> : vector<16xf32>
    %27 = vector.multi_reduction <add>, %26, %cst_8 [1] : vector<16x128xf32> to vector<16xf32>
    %28 = vector.shape_cast %27 : vector<16xf32> to vector<16x1xf32>
    %cst_9 = arith.constant 1.000000e-10 : f32
    %29 = vector.broadcast %cst_9 : f32 to vector<16x1xf32>
    %30 = arith.addf %28, %29 : vector<16x1xf32>
    %31 = tpu.reciprocal %30 : vector<16x1xf32> -> vector<16x1xf32>
    %32 = vector.broadcast %31 : vector<16x1xf32> to vector<16x128xf32>
    %33 = arith.mulf %26, %32 : vector<16x128xf32>
    %c0_10 = arith.constant 0 : index
    %c0_11 = arith.constant 0 : index
    %34 = vector.load %arg2[%c0_10, %c0_11] : memref<16x128xf32, #tpu.memory_space<vmem>>, vector<16x128xf32>
    tpu.vector_store %arg2[%c0_10, %c0_11], %33 {strides = array<i32>} : memref<16x128xf32, #tpu.memory_space<vmem>>, vector<16x128xf32>,
    return
  }
  func.func @transform_0(%arg0: i32) -> (i32, i32) {
    %c0_i32 = arith.constant 0 : i32
    %c0_i32_0 = arith.constant 0 : i32
    return %arg0, %c0_i32 : i32, i32
  }
  func.func @transform_1(%arg0: i32) -> (i32, i32) {
    %c0_i32 = arith.constant 0 : i32
    %c0_i32_0 = arith.constant 0 : i32
    return %arg0, %c0_i32 : i32, i32
  }
}

</mosaic_0001>

<llo_original>
// kernel: tpu_custom_call.1
$region0: #{tpu_custom_call.1}
  #allocation0 [shape = 'u32[]', space=smem, size = 0x4, offset = 0x4, fixed_abs, tag = 'smem constant byte address 0x4 - core index']
  #allocation1 [shape = 'u32[72,128]{1,0:T(1,128)}', space=vmem, size = 0x9000, scoped, tag = 'internal scratch']
  %s0 = inlined_call_operand.hbm [shape: f32[16,128], index: 0, kind: input, shape index: {}]
  %s1 = inlined_call_operand.hbm [shape: f32[16,128], index: 1, kind: output, shape index: {}]
  %s2 = sld [smem:[#allocation0]]
  $region18: #{tpu_custom_call.1} parent=0
    _
  %s4 = ssub.s32 1, %s2
  %s5 = scalar_select 0, %s4, %s2
  $region1: #{tpu_custom_call.1} parent=0
    #allocation2 [shape = 'u8[8192]{0}', space=vmem, size = 0x2000, scoped, tag = 'input window, operand 0, single buffered']
    #allocation3 [shape = 's32[1]{0}', space=sflag, size = 0x4, scoped, tag = 'scoped memory for tpu_custom_call.1']
    #allocation4 [shape = 's32[1]{0}', space=sflag, size = 0x4, scoped, tag = 'scoped memory for tpu_custom_call.1']
    #allocation5 [shape = 'u8[8192]{0}', space=vmem, size = 0x2000, scoped, tag = 'output window, operand 0, single buffered']
    %6 = vsyncpa [#allocation3], 0
    %7 = vsyncpa [#allocation4], 0
    // Predicated region
    $region2: #{tpu_custom_call.1} parent=1 // pred_check
      _
    $region3: #{tpu_custom_call.1} parent=1 // pred_check_branch
      %9 = sbr.rel (0) target = $region5
    $region4: #{tpu_custom_call.1} parent=1 // pred_region
      %11 = vsyncadd [#allocation3], 0
      %s12 = sshll.u32 %s0, 4
      %s13 = int_to_ptr.hbm [resolvable:$true] %s12
      %s14 = sshll.u32 [#allocation2], 4
      %s15 = int_to_ptr.vmem [resolvable:$true] %s14
      %20 = dma.hbm_to_vmem [thread:$0]  %s13, 256, %s15, [#allocation3], 128, 128, 8
    $region5: #{tpu_custom_call.1} parent=1 // pred_fallthru
      _
    // Predicated region
    $region6: #{tpu_custom_call.1} parent=1 // pred_check
      _
    $region7: #{tpu_custom_call.1} parent=1 // pred_check_branch
      %22 = sbr.rel (0) target = $region9
    $region8: #{tpu_custom_call.1} parent=1 // pred_region
      %24 = dma.done [#allocation3], 256
    $region9: #{tpu_custom_call.1} parent=1 // pred_fallthru
      _
    %v25 = vld [vmem:[#allocation2] sm:$0xff]
    %v26 = vld [vmem:[#allocation2 + $0x8] sm:$0xff]
    %v27 = vmax.f32 %v25, 0.0
    %v28 = vmax.f32 %v26, 0.0
    %v29 = vadd.f32 %v27, 1.0
    %v30 = vlog2.pop %v29
    %v31 = vmul.f32 %v30, 0.6931472
    %v32 = vmul.f32 -0.5, %v27
    %v33 = vadd.f32 %v32, 1.0
    %v34 = vmul.f32 %v33, %v27
    %v35 = vand.u32 2147483647, %v27
    %vm36 = vcmp.lt.f32.partialorder %v35, 0.0004427343
    %v37 = vsel %vm36, %v34, %v31
    %v38 = vadd.f32 %v28, 1.0
    %v39 = vlog2.pop %v38
    %v40 = vmul.f32 %v39, 0.6931472
    %v41 = vmul.f32 -0.5, %v28
    %v42 = vadd.f32 %v41, 1.0
    %v43 = vmul.f32 %v42, %v28
    %v44 = vand.u32 2147483647, %v28
    %vm45 = vcmp.lt.f32.partialorder %v44, 0.0004427343
    %v46 = vsel %vm45, %v43, %v40
    %v47 = vadd.f32 %v37, 1.0
    %v48 = vadd.f32 %v46, 1.0
    %v49 = vrcp.pop %v47
    %v50 = vmul.f32 %v47, %v49
    %v51 = vsub.f32 1.0, %v50
    %v52 = vmul.f32 %v49, %v51
    %v53 = vadd.f32 %v49, %v52
    %vm54 = vweird.f32 %v47
    %vm55 = vweird.f32 %v49
    %vm56 = vmor %vm54, %vm55
    %v57 = vsel %vm56, %v49, %v53
    %v58 = vand.u32 2147483647, %v47
    %vm59 = vcmp.eq.f32.partialorder %v58, 8.507059e+37
    %v60 = vand.u32 %v47, 2147483648
    %v61 = vor.u32 1.1754944e-38, %v60
    %v62 = vsel %vm59, %v61, %v57
    %v63 = vmul.f32 %v25, %v62
    %v64 = vrcp.pop %v48
    %v65 = vmul.f32 %v48, %v64
    %v66 = vsub.f32 1.0, %v65
    %v67 = vmul.f32 %v64, %v66
    %v68 = vadd.f32 %v64, %v67
    %vm69 = vweird.f32 %v48
    %vm70 = vweird.f32 %v64
    %vm71 = vmor %vm69, %vm70
    %v72 = vsel %vm71, %v64, %v68
    %v73 = vand.u32 2147483647, %v48
    %vm74 = vcmp.eq.f32.partialorder %v73, 8.507059e+37
    %v75 = vand.u32 %v48, 2147483648
    %v76 = vor.u32 1.1754944e-38, %v75
    %v77 = vsel %vm74, %v76, %v72
    %v78 = vmul.f32 %v26, %v77
    %v79 = vtanh.pop %v63
    %v80 = vtanh.pop %v78
    %v81 = vadd.f32 %v79, 1.0
    %v82 = vadd.f32 %v80, 1.0
    %v83 = vmul.f32 %v81, 0.5
    %v84 = vmul.f32 %v82, 0.5
    %85 = vmax.xlane.f32.xlu0 %v25
    %v86 = vpop.xlane.xlu0 %85
    %87 = vmax.xlane.f32.xlu0 %v26
    %v88 = vpop.xlane.xlu0 %87
    %v89 = vsub.f32 %v25, %v86
    %v90 = vsub.f32 %v26, %v88
    %v91 = vmul.f32 %v89, 1.442695
    %v92 = vpow.pop %v91
    %v93 = vmul.f32 %v90, 1.442695
    %v94 = vpow.pop %v93
    %95 = vadd.xlane.f32.xlu0 %v92
    %v96 = vpop.xlane.xlu0 %95
    %97 = vadd.xlane.f32.xlu0 %v94
    %v98 = vpop.xlane.xlu0 %97
    %v99 = vrcp.pop %v96
    %v100 = vmul.f32 %v96, %v99
    %v101 = vsub.f32 1.0, %v100
    %v102 = vmul.f32 %v99, %v101
    %v103 = vadd.f32 %v99, %v102
    %vm104 = vweird.f32 %v96
    %vm105 = vweird.f32 %v99
    %vm106 = vmor %vm104, %vm105
    %v107 = vsel %vm106, %v99, %v103
    %v108 = vand.u32 2147483647, %v96
    %vm109 = vcmp.eq.f32.partialorder %v108, 8.507059e+37
    %v110 = vand.u32 %v96, 2147483648
    %v111 = vor.u32 1.1754944e-38, %v110
    %v112 = vsel %vm109, %v111, %v107
    %v113 = vrcp.pop %v98
    %v114 = vmul.f32 %v98, %v113
    %v115 = vsub.f32 1.0, %v114
    %v116 = vmul.f32 %v113, %v115
    %v117 = vadd.f32 %v113, %v116
    %vm118 = vweird.f32 %v98
    %vm119 = vweird.f32 %v113
    %vm120 = vmor %vm118, %vm119
    %v121 = vsel %vm120, %v113, %v117
    %v122 = vand.u32 2147483647, %v98
    %vm123 = vcmp.eq.f32.partialorder %v122, 8.507059e+37
    %v124 = vand.u32 %v98, 2147483648
    %v125 = vor.u32 1.1754944e-38, %v124
    %v126 = vsel %vm123, %v125, %v121
    %v127 = vmul.f32 %v92, %v112
    %v128 = vmul.f32 %v94, %v126
    %v129 = vmul.f32 %v83, 0.5
    %v130 = vmul.f32 %v84, 0.5
    %v131 = vmul.f32 %v127, 0.5
    %v132 = vmul.f32 %v128, 0.5
    %v133 = vadd.f32 %v129, %v131
    %v134 = vadd.f32 %v130, %v132
    %135 = vadd.xlane.f32.xlu0 %v133
    %v136 = vpop.xlane.xlu0 %135
    %137 = vadd.xlane.f32.xlu0 %v134
    %v138 = vpop.xlane.xlu0 %137
    %v139 = vadd.f32 %v136, 1e-10
    %v140 = vadd.f32 %v138, 1e-10
    %v141 = vrcp.pop %v139
    %v142 = vmul.f32 %v139, %v141
    %v143 = vsub.f32 1.0, %v142
    %v144 = vmul.f32 %v141, %v143
    %v145 = vadd.f32 %v141, %v144
    %vm146 = vweird.f32 %v139
    %vm147 = vweird.f32 %v141
    %vm148 = vmor %vm146, %vm147
    %v149 = vsel %vm148, %v141, %v145
    %v150 = vand.u32 2147483647, %v139
    %vm151 = vcmp.eq.f32.partialorder %v150, 8.507059e+37
    %v152 = vand.u32 %v139, 2147483648
    %v153 = vor.u32 1.1754944e-38, %v152
    %v154 = vsel %vm151, %v153, %v149
    %v155 = vrcp.pop %v140
    %v156 = vmul.f32 %v140, %v155
    %v157 = vsub.f32 1.0, %v156
    %v158 = vmul.f32 %v155, %v157
    %v159 = vadd.f32 %v155, %v158
    %vm160 = vweird.f32 %v140
    %vm161 = vweird.f32 %v155
    %vm162 = vmor %vm160, %vm161
    %v163 = vsel %vm162, %v155, %v159
    %v164 = vand.u32 2147483647, %v140
    %vm165 = vcmp.eq.f32.partialorder %v164, 8.507059e+37
    %v166 = vand.u32 %v140, 2147483648
    %v167 = vor.u32 1.1754944e-38, %v166
    %v168 = vsel %vm165, %v167, %v163
    %v169 = vmul.f32 %v133, %v154
    %v170 = vmul.f32 %v134, %v168
    %171 = vst [vmem:[#allocation5] sm:$0xff] %v169
    %172 = vst [vmem:[#allocation5 + $0x8] sm:$0xff] %v170
    // Predicated region
    $region10: #{tpu_custom_call.1} parent=1 // pred_check
      _
    $region11: #{tpu_custom_call.1} parent=1 // pred_check_branch
      %174 = sbr.rel (0) target = $region13
    $region12: #{tpu_custom_call.1} parent=1 // pred_region
      %176 = vsyncadd [#allocation4], 0
      %s177 = sshll.u32 [#allocation5], 4
      %s178 = int_to_ptr.vmem [resolvable:$true] %s177
      %s179 = sshll.u32 %s1, 4
      %s180 = int_to_ptr.hbm [resolvable:$true] %s179
      %185 = dma.vmem_to_hbm [thread:$0]  %s178, 256, %s180, [#allocation4], 128, 128, 8
    $region13: #{tpu_custom_call.1} parent=1 // pred_fallthru
      _
    // Predicated region
    $region14: #{tpu_custom_call.1} parent=1 // pred_check
      _
    $region15: #{tpu_custom_call.1} parent=1 // pred_check_branch
      %187 = sbr.rel (0) target = $region17
    $region16: #{tpu_custom_call.1} parent=1 // pred_region
      %189 = dma.done [#allocation4], 256
    $region17: #{tpu_custom_call.1} parent=1 // pred_fallthru
      _
    %190 = vsyncpa [#allocation3], 1
    %191 = vsyncpa [#allocation4], 1

</llo_original>
